<compile_context>
chip_gen: v6e
topology: v6e:2x2x1
jax: 0.10.0
libtpu: 0.0.40
codegen_flags: <defaults>
</compile_context>

<pallas_src>
import functools

import jax
import jax.numpy as jnp
import numpy as np
from jax import lax
from jax.experimental import pallas as pl
from jax.experimental.pallas import tpu as pltpu


def _round_up(x, m):
    return (x + m - 1) // m * m


@functools.lru_cache(maxsize=1)
def _roll_is_numpy_convention():
    """Probe pltpu.roll's direction convention once with a tiny kernel.

    Returns True iff pltpu.roll matches numpy (roll(x, 1)[i] == x[i - 1]).
    The main kernel compensates by negating the roll amounts if needed.
    """

    def probe(x_ref, o_ref):
        o_ref[...] = pltpu.roll(x_ref[...], 1, axis=1)

    x = jnp.arange(8 * 128, dtype=jnp.int32).reshape(8, 128)
    y = pl.pallas_call(
        probe, out_shape=jax.ShapeDtypeStruct((8, 128), jnp.int32))(x)
    return int(jax.device_get(y[0, 1])) == 0


def _vmem_capacity_bytes():
    try:
        cap = getattr(pltpu.get_tpu_info(), "vmem_capacity_bytes", None)
        if cap:
            return int(cap)
    except Exception:
        pass
    return 64 * 1024 * 1024  # conservative: v7x per-TensorCore VMEM


def _fold_bn(gamma, beta, mean, var, eps=1e-5):
    scale = gamma / jnp.sqrt(var + eps)
    bias = beta - mean * scale
    return scale, bias


def _pack_weights(w_hwio, bn_scale, cin_p):
    """(3,3,Cin,Cout) HWIO -> (9*cin_p, Cout) bf16, BN scale folded, K-major.

    Tap order is (dy, dx) row-major, channel-minor, matching the kernel's
    im2col concatenation; K-major layout lets the kernel contract with
    dimension_numbers ((0,),(0,)) (no per-stage weight relayout).
    """
    kh, kw, cin, cout = w_hwio.shape
    assert (kh, kw) == (3, 3)
    w = w_hwio * bn_scale.reshape(1, 1, 1, cout)          # fold BN scale
    if cin_p != cin:
        w = jnp.pad(w, ((0, 0), (0, 0), (0, cin_p - cin), (0, 0)))
    return w.reshape(9 * cin_p, cout).astype(jnp.bfloat16)


def _make_block_kernel(H, w_lane, rb_rows, roll_is_numpy):
    """Fused 3-stage kernel for one (batch, row-block) grid step."""
    n_rows = rb_rows + 6                    # 3-row halo per side
    L = n_rows * w_lane                     # flat block length (lane axis)
    l_out = rb_rows * w_lane                # flat output length
    # Tap (dy, dx): output flat position p needs input at p + dy*w_lane + dx-1
    # (the frame skews down by one row per stage, which the halo absorbs).
    shifts = [dy * w_lane + (dx - 1) for dy in range(3) for dx in range(3)]

    def shifted(x, s):
        if s == 0:
            return x
        amt = (-s) % L if roll_is_numpy else s % L
        return pltpu.roll(x, amt, axis=1)   # bf16 lane roll (XLU slot)

    def conv(x_bf, w_ref, out_len):
        # Single-matmul 3x3 conv: im2col = 9 lane rolls stacked along
        # sublanes, then (9*Cin, Cout) contracted with (9*Cin, out_len).
        parts = [shifted(x_bf, s)[:, :out_len] for s in shifts]
        patches = jnp.concatenate(parts, axis=0)
        return lax.dot_general(
            w_ref[...], patches,
            dimension_numbers=(((0,), (0,)), ((), ())),
            preferred_element_type=jnp.float32)

    def kernel(x_hbm, w0_ref, w1_ref, w2_ref, b_ref, cm_ref, o_ref, xbuf, sem):
        # x_hbm : (N, Cin_p, H_tot*w_lane) bf16 in HBM (pl.ANY)
        # w*    : (9*Cin_p, Cout) bf16, BN scale folded
        # b_ref : (3, Cout, 1) f32 folded BN bias
        # cm_ref: (1, L) f32 column mask (1.0 at image columns)
        # o_ref : (1, Cout, l_out) f32 output block
        # xbuf  : (2, Cin_p, L) bf16 input double buffer; sem: DMA((2,))
        n = pl.program_id(0)
        rb = pl.program_id(1)
        n_rb = pl.num_programs(1)
        slot = lax.rem(rb, 2)

        def copy_in(block, slot_):
            start = pl.multiple_of(block * l_out, 128)
            return pltpu.make_async_copy(
                x_hbm.at[n, :, pl.ds(start, L)], xbuf.at[slot_], sem.at[slot_])

        cur = copy_in(rb, slot)

        @pl.when(rb == 0)
        def _():
            cur.start()                      # first block of this batch elem

        @pl.when(rb + 1 < n_rb)
        def _():
            copy_in(rb + 1, 1 - slot).start()   # prefetch next row block

        cur.wait()
        x = xbuf[slot]                       # (Cin_p, L) bf16

        # Masks: static column validity (input) x dynamic row validity (iota
        # threshold -- zero-padding rows above/below the image).  The final
        # stage is NOT masked: its halo/tail is cropped in the wrapper.
        flat = lax.broadcasted_iota(jnp.int32, (1, L), 1)
        colmask = cm_ref[...]
        g0 = rb * rb_rows                    # first output image row

        def stage_mask(first_img_row):
            lo = (0 - first_img_row) * w_lane
            hi = (H - first_img_row) * w_lane
            return jnp.where((flat >= lo) & (flat < hi), colmask, 0.0)

        # stage 0: conv0 | BN1 | ReLU   (f32 kept for the residual, bf16 for
        # the next stage's rolls)
        a0_f32 = (jnp.maximum(conv(x, w0_ref, L) + b_ref[0], 0.0)
                  * stage_mask(g0 - 2))
        a0_bf = a0_f32.astype(jnp.bfloat16)
        # stage 1: conv1 | BN2 | ReLU
        a1_bf = ((jnp.maximum(conv(a0_bf, w1_ref, L) + b_ref[1], 0.0)
                  * stage_mask(g0 - 1)).astype(jnp.bfloat16))
        # stage 2: conv2 | BN3 | +identity | ReLU  (only the Rb output rows)
        resid = a0_f32[:, 2 * w_lane: 2 * w_lane + l_out]
        a2 = jnp.maximum(conv(a1_bf, w2_ref, l_out) + b_ref[2] + resid, 0.0)
        o_ref[0] = a2.astype(o_ref.dtype)

    return kernel


def _pick_row_block(h, w_lane, cin_p, cout, budget):
    """Largest row block (multiple of 8) whose live set fits `budget` bytes."""
    c = max(cin_p, cout)
    best, rb = 8, 8
    h_cap = _round_up(max(h, 8), 8)
    while rb <= h_cap:
        L = (rb + 6) * w_lane
        live = (2 * cin_p * L * 2              # input double buffer (bf16)
                + 9 * c * L * 2                # im2col patches (bf16)
                + cout * L * (4 + 2 + 2 + 4)   # a0 f32+bf16, a1 bf16, acc f32
                + 2 * cout * rb * w_lane * 4)  # output double buffer (f32)
        if live > budget:
            break
        best = rb
        rb += 8
    if h > 8:  # keep >= 2 row blocks per image so the pipeline has depth
        best = min(best, _round_up(-(-h // 2), 8))
    return max(best, 8)


def _fused_block_call(x, w0_all, w1_all, w2_all, b_all, *, cin_p, cout,
                      roll_is_numpy, row_block=None):
    """x: (N, Cin, H, W) NCHW float32 -> (N, cout, H, W) float32."""
    n, cin, h, w = x.shape
    w_lane = _round_up(w + 2, 128)

    vmem_cap = _vmem_capacity_bytes()
    vmem_limit = max(32 << 20, min(int(vmem_cap * 3 // 4), 100 << 20))
    if row_block is None:
        row_block = _pick_row_block(h, w_lane, cin_p, cout,
                                    budget=int(vmem_limit * 0.7))
    rb_sz = row_block
    n_rb = -(-h // rb_sz)
    h_span = n_rb * rb_sz
    h_tot = h_span + 6

    # Single wrapper-side pad of the raw input: channels -> cin_p, 3 halo rows
    # per side (+ block-span fill), 1 halo col + lane tail; cast to bf16
    # (halves the input DMA; the MXU operands are bf16 anyway).
    x_p = jnp.pad(x, ((0, 0), (0, cin_p - cin), (3, 3 + h_span - h),
                      (1, w_lane - w - 1))).astype(jnp.bfloat16)
    x_flat = x_p.reshape(n, cin_p, h_tot * w_lane)

    L = (rb_sz + 6) * w_lane
    l_out = rb_sz * w_lane

    # Static column-validity mask over one block frame (image cols at lanes
    # [1, W]); tiny, fetched once.
    cm = np.zeros((1, w_lane), np.float32)
    cm[0, 1:w + 1] = 1.0
    colmask = jnp.asarray(np.tile(cm, (1, rb_sz + 6)))

    kernel = _make_block_kernel(h, w_lane, rb_sz, roll_is_numpy)

    out_flat = pl.pallas_call(
        kernel,
        out_shape=jax.ShapeDtypeStruct((n, cout, n_rb * l_out), jnp.float32),
        grid=(n, n_rb),
        in_specs=[
            pl.BlockSpec(memory_space=pl.ANY),                  # x (HBM)
            pl.BlockSpec(w0_all.shape, lambda i, j: (0, 0)),
            pl.BlockSpec(w1_all.shape, lambda i, j: (0, 0)),
            pl.BlockSpec(w2_all.shape, lambda i, j: (0, 0)),
            pl.BlockSpec(b_all.shape, lambda i, j: (0, 0, 0)),
            pl.BlockSpec(colmask.shape, lambda i, j: (0, 0)),
        ],
        out_specs=pl.BlockSpec((1, cout, l_out), lambda i, j: (i, 0, j)),
        scratch_shapes=[
            pltpu.VMEM((2, cin_p, L), jnp.bfloat16),            # input dbl buf
            pltpu.SemaphoreType.DMA((2,)),
        ],
        compiler_params=pltpu.CompilerParams(
            dimension_semantics=("parallel", "arbitrary"),
            vmem_limit_bytes=vmem_limit),
    )(x_flat, w0_all, w1_all, w2_all, b_all, colmask)

    out = out_flat.reshape(n, cout, h_span, w_lane)
    return out[:, :, :h, 1:1 + w]


class Dense2DBasicBlockV:
    """JAX/Pallas port of Dense2DBasicBlockV (eval-mode BatchNorm), NCHW."""

    expansion = 1

    def __init__(self, inplanes, planes, stride=1, key=None):
        assert stride == 1, "only stride=1 supported in this Pallas port"
        if key is None:
            key = jax.random.PRNGKey(0)
        ks = jax.random.split(key, 6)

        def conv_w(k, cin, cout):
            fan_in = 9 * cin
            return (jax.random.normal(k, (3, 3, cin, cout), jnp.float32)
                    * (2.0 / fan_in) ** 0.5)

        def bn_params(k, c):
            kg, kb, km, kv = jax.random.split(k, 4)
            gamma = 1.0 + 0.1 * jax.random.normal(kg, (c,), jnp.float32)
            beta = 0.1 * jax.random.normal(kb, (c,), jnp.float32)
            mean = 0.05 * jax.random.normal(km, (c,), jnp.float32)
            var = 1.0 + 0.1 * jax.random.uniform(kv, (c,), jnp.float32)
            return _fold_bn(gamma, beta, mean, var)

        self.inplanes, self.planes = inplanes, planes
        self.w0 = conv_w(ks[0], inplanes, planes)
        self.w1 = conv_w(ks[1], planes, planes)
        self.w2 = conv_w(ks[2], planes, planes)
        self.s0, self.b0 = bn_params(ks[3], planes)
        self.s1, self.b1 = bn_params(ks[4], planes)
        self.s2, self.b2 = bn_params(ks[5], planes)

        # Kernel-side parameters: BN scale folded into bf16 weights packed
        # K-major (tap-major, channel-minor), bias kept in f32.
        self._cin_p = _round_up(inplanes, 8)
        self._roll_numpy = _roll_is_numpy_convention()
        self.w0_all = _pack_weights(self.w0, self.s0, self._cin_p)
        self.w1_all = _pack_weights(self.w1, self.s1, planes)
        self.w2_all = _pack_weights(self.w2, self.s2, planes)
        self.b_all = (jnp.stack([self.b0, self.b1, self.b2])
                      .reshape(3, planes, 1).astype(jnp.float32))

    def __call__(self, x, row_block=None):
        # x: (N, Cin, H, W) NCHW, like the PyTorch module.
        assert x.shape[1] == self.inplanes
        return _fused_block_call(
            x, self.w0_all, self.w1_all, self.w2_all, self.b_all,
            cin_p=self._cin_p, cout=self.planes,
            roll_is_numpy=self._roll_numpy, row_block=row_block)


def _reference_forward_f32(block, x):
    """Pure-f32 reference (exact module semantics) via lax.conv NCHW/HWIO."""

    def conv_bn(x, w, s, b, residual=None):
        y = lax.conv_general_dilated(
            x, w, window_strides=(1, 1), padding="SAME",
            dimension_numbers=("NCHW", "HWIO", "NCHW"))
        y = y * s.reshape(1, -1, 1, 1) + b.reshape(1, -1, 1, 1)
        if residual is not None:
            y = y + residual
        return jnp.maximum(y, 0.0)

    a0 = conv_bn(x, block.w0, block.s0, block.b0)
    a1 = conv_bn(a0, block.w1, block.s1, block.b1)
    return conv_bn(a1, block.w2, block.s2, block.b2, residual=a0)


def _reference_forward_bf16(block, x):
    """Reference mirroring the kernel numerics: bf16 operands, f32 accum."""
    bf = lambda a: a.astype(jnp.bfloat16).astype(jnp.float32)

    def conv_bn(x, w, s, b, residual=None):
        wq = bf(w * s.reshape(1, 1, 1, -1))
        y = lax.conv_general_dilated(
            bf(x), wq, window_strides=(1, 1), padding="SAME",
            dimension_numbers=("NCHW", "HWIO", "NCHW"),
            preferred_element_type=jnp.float32)
        y = y + b.reshape(1, -1, 1, 1)
        if residual is not None:
            y = y + residual
        return jnp.maximum(y, 0.0)

    a0 = conv_bn(x, block.w0, block.s0, block.b0)
    a1 = conv_bn(a0, block.w1, block.s1, block.b1)
    return conv_bn(a1, block.w2, block.s2, block.b2, residual=a0)


def _check(block, x, out):
    ref_q = jax.block_until_ready(_reference_forward_bf16(block, x))
    assert jnp.allclose(out, ref_q, atol=1e-2, rtol=1e-2), \
        "mismatch vs bf16-emulating reference"
    ref = jax.block_until_ready(_reference_forward_f32(block, x))
    rel_err = jnp.max(jnp.abs(out - ref)) / jnp.max(jnp.abs(ref))
    assert float(rel_err) < 0.05, "mismatch vs f32 reference"


if __name__ == "__main__":
    key = jax.random.PRNGKey(0)
    k_x, k_p, k_x2, k_p2 = jax.random.split(key, 4)

    # Primary config (small shapes consistent with the module).
    N, Cin, H, W = 2, 4, 16, 16
    planes = 32
    x = jax.random.normal(k_x, (N, Cin, H, W), jnp.float32)
    block = Dense2DBasicBlockV(Cin, planes, stride=1, key=k_p)
    out = jax.block_until_ready(block(x))
    assert out.shape == (N, planes, H, W)
    _check(block, x, out)

    # Secondary config: H not a multiple of the row block and odd W,
    # exercising the row masks at the image bottom edge and the output crop.
    x2 = jax.random.normal(k_x2, (1, 3, 13, 10), jnp.float32)
    block2 = Dense2DBasicBlockV(3, 16, stride=1, key=k_p2)
    out2 = jax.block_until_ready(block2(x2))
    assert out2.shape == (1, 16, 13, 10)
    _check(block2, x2, out2)

    print("KERNEL_OK")
</pallas_src>

<mosaic_0001>
module attributes {stable_mosaic.version = 11 : i64} {
  func.func @probe(%arg0: memref<8x128xi32, #tpu.memory_space<vmem>>, %arg1: memref<8x128xi32, #tpu.memory_space<vmem>>) attributes {dimension_semantics = [], scalar_prefetch = 0 : i64, scratch_operands = 0 : i64, tpu.core_type = #tpu.core_type<tc>} {
    %c0 = arith.constant 0 : index
    %c0_0 = arith.constant 0 : index
    %0 = vector.load %arg0[%c0, %c0_0] : memref<8x128xi32, #tpu.memory_space<vmem>>, vector<8x128xi32>
    %c1_i32 = arith.constant 1 : i32
    %1 = tpu.dynamic_rotate %0 by %c1_i32 dim 1 : vector<8x128xi32>, i32 -> vector<8x128xi32>
    %c0_1 = arith.constant 0 : index
    %c0_2 = arith.constant 0 : index
    %2 = vector.load %arg1[%c0_1, %c0_2] : memref<8x128xi32, #tpu.memory_space<vmem>>, vector<8x128xi32>
    tpu.vector_store %arg1[%c0_1, %c0_2], %1 {strides = array<i32>} : memref<8x128xi32, #tpu.memory_space<vmem>>, vector<8x128xi32>,
    return
  }
}

</mosaic_0001>

<llo_original>
// kernel: tpu_custom_call.1
$region0: #{tpu_custom_call.1}
  #allocation0 [shape = 'u32[]', space=smem, size = 0x4, offset = 0x4, fixed_abs, tag = 'smem constant byte address 0x4 - core index']
  #allocation1 [shape = 'u32[144,128]{1,0:T(1,128)}', space=vmem, size = 0x12000, scoped, tag = 'internal scratch']
  %s0 = inlined_call_operand.hbm [shape: s32[8,128], index: 0, kind: input, shape index: {}]
  %s1 = inlined_call_operand.hbm [shape: s32[8,128], index: 1, kind: output, shape index: {}]
  %s2 = sld [smem:[#allocation0]]
  $region18: #{tpu_custom_call.1} parent=0
    _
  %s4 = ssub.s32 1, %s2
  %s5 = scalar_select 0, %s4, %s2
  $region1: #{tpu_custom_call.1} parent=0
    #allocation2 [shape = 'u8[4096]{0}', space=vmem, size = 0x1000, scoped, tag = 'input window, operand 0, single buffered']
    #allocation3 [shape = 's32[1]{0}', space=sflag, size = 0x4, scoped, tag = 'scoped memory for tpu_custom_call.1']
    #allocation4 [shape = 's32[1]{0}', space=sflag, size = 0x4, scoped, tag = 'scoped memory for tpu_custom_call.1']
    #allocation5 [shape = 'u8[4096]{0}', space=vmem, size = 0x1000, scoped, tag = 'output window, operand 0, single buffered']
    %6 = vsyncpa [#allocation3], 0
    %7 = vsyncpa [#allocation4], 0
    // Predicated region
    $region2: #{tpu_custom_call.1} parent=1 // pred_check
      _
    $region3: #{tpu_custom_call.1} parent=1 // pred_check_branch
      %9 = sbr.rel (0) target = $region5
    $region4: #{tpu_custom_call.1} parent=1 // pred_region
      %s11 = ssub.s32 128, 128
      %12 = vsyncadd [#allocation3], %s11
      %s14 = sshll.u32 [#allocation2], 4
      %s15 = int_to_ptr.vmem [resolvable:$true] %s14
      %17 = dma.hbm_to_vmem [thread:$0]  %s0, 128, %s15, [#allocation3]
    $region5: #{tpu_custom_call.1} parent=1 // pred_fallthru
      _
    // Predicated region
    $region6: #{tpu_custom_call.1} parent=1 // pred_check
      _
    $region7: #{tpu_custom_call.1} parent=1 // pred_check_branch
      %19 = sbr.rel (0) target = $region9
    $region8: #{tpu_custom_call.1} parent=1 // pred_region
      %20 = dma.done [#allocation3], 128
    $region9: #{tpu_custom_call.1} parent=1 // pred_fallthru
      _
    %v21 = vld [vmem:[#allocation2] sm:$0xff]
    %22 = vrot.lane.b32.xlu0 %v21, 1
    %v23 = vpop.permute.xlu0 %22
    %24 = vst [vmem:[#allocation5] sm:$0xff] %v23
    // Predicated region
    $region10: #{tpu_custom_call.1} parent=1 // pred_check
      _
    $region11: #{tpu_custom_call.1} parent=1 // pred_check_branch
      %26 = sbr.rel (0) target = $region13
    $region12: #{tpu_custom_call.1} parent=1 // pred_region
      %s28 = ssub.s32 128, 128
      %29 = vsyncadd [#allocation4], %s28
      %s31 = sshll.u32 [#allocation5], 4
      %s32 = int_to_ptr.vmem [resolvable:$true] %s31
      %34 = dma.vmem_to_hbm [thread:$0]  %s32, 128, %s1, [#allocation4]
    $region13: #{tpu_custom_call.1} parent=1 // pred_fallthru
      _
    // Predicated region
    $region14: #{tpu_custom_call.1} parent=1 // pred_check
      _
    $region15: #{tpu_custom_call.1} parent=1 // pred_check_branch
      %36 = sbr.rel (0) target = $region17
    $region16: #{tpu_custom_call.1} parent=1 // pred_region
      %37 = dma.done [#allocation4], 128
    $region17: #{tpu_custom_call.1} parent=1 // pred_fallthru
      _
    %38 = vsyncpa [#allocation3], 1
    %39 = vsyncpa [#allocation4], 1

</llo_original>
